<compile_context>
chip_gen: v7x
topology: tpu7x:2x2x1
jax: 0.10.0
libtpu: 0.0.40
codegen_flags: <defaults>
</compile_context>

<pallas_src>
import functools

import jax
import jax.numpy as jnp
from jax import lax
from jax.experimental import pallas as pl
from jax.experimental.pallas import tpu as pltpu


# --------------------------------------------------------------------------
# Fused per-batch kernel:
#   * get_edges(label)  (neighbor-inequality edge map, flat H*W lane axis)
#   * Encoder_input slab write: [current, last, label, instance, next]
#   * pair_optimize blend: fake_next = fake*weight + (1-weight)*current
# --------------------------------------------------------------------------
def _scar_fused_kernel(cur_ref, last_ref, label_ref, nxt_ref, fake_ref, w_ref,
                       enc_ref, fn_ref, *, W):
    cur = cur_ref[0]                       # (C, HW) f32
    lst = last_ref[0]
    lab = label_ref[0]                     # native dtype, compared in-register
    nxt = nxt_ref[0]
    HW = lab.shape[-1]

    # ---- get_edges on the flattened (H*W) lane axis ----------------------
    # Neighbor-left is roll(1), neighbor-up is roll(W) (XLU slot, cheap).
    # Wrap-around entries (first column / first row) are masked with a small
    # iota mask computed on a (1, HW) row and broadcast over C.
    col = lax.broadcasted_iota(jnp.int32, (1, HW), 1)
    mask_w = (col % W) > 0                 # not the first column of a row
    mask_h = col >= W                      # not the first row
    lab_l = pltpu.roll(lab, shift=1, axis=1)      # lab[p-1]
    lab_u = pltpu.roll(lab, shift=W, axis=1)      # lab[p-W]
    dh = jnp.where((lab != lab_l) & mask_w, 1.0, 0.0)   # covers edge[..., 1:]
    dv = jnp.where((lab != lab_u) & mask_h, 1.0, 0.0)   # covers edge[:, 1:, :]
    dh_r = pltpu.roll(dh, shift=HW - 1, axis=1)   # dh[p+1] -> edge[..., :-1]
    dv_d = pltpu.roll(dv, shift=HW - W, axis=1)   # dv[p+W] -> edge[:, :-1, :]
    edges = jnp.maximum(jnp.maximum(dh, dh_r), jnp.maximum(dv, dv_d))

    # ---- Encoder_input slab (dim 1 = component) ---------------------------
    enc_ref[0, 0, :, :] = cur
    enc_ref[0, 1, :, :] = lst
    enc_ref[0, 2, :, :] = lab.astype(enc_ref.dtype)
    enc_ref[0, 3, :, :] = edges
    enc_ref[0, 4, :, :] = nxt

    # ---- pair_optimize blend ----------------------------------------------
    w = w_ref[0]                            # (1, HW), broadcasts over C
    fn_ref[0] = fake_ref[0] * w + (1.0 - w) * cur


# --------------------------------------------------------------------------
# SCAR forward glue (pre_process_input with use_label + use_instance,
# reparameterize, and the fake/current blend from pair_optimize)
# --------------------------------------------------------------------------
def scar_forward(current, last, nxt, label, mu, logvar, eps, fake, weight):
    B, C, H, W = current.shape
    HW = H * W

    # Lane-dense views: collapsing the trailing (H, W) dims of a contiguous
    # NCHW tensor is a free layout no-op but makes every vector load/store
    # use all 128 lanes (W=16 tiles would waste 7/8 of each vreg).
    def flat(x):
        return x.reshape(x.shape[0], x.shape[1], HW)

    img_spec = pl.BlockSpec((1, C, HW), lambda b: (b, 0, 0))
    w_spec = pl.BlockSpec((1, 1, HW), lambda b: (b, 0, 0))

    enc5, fake_next = pl.pallas_call(
        functools.partial(_scar_fused_kernel, W=W),
        grid=(B,),
        in_specs=[img_spec, img_spec, img_spec, img_spec, img_spec, w_spec],
        out_specs=[
            pl.BlockSpec((1, 5, C, HW), lambda b: (b, 0, 0, 0)),
            img_spec,
        ],
        out_shape=[
            jax.ShapeDtypeStruct((B, 5, C, HW), jnp.float32),
            jax.ShapeDtypeStruct((B, C, HW), jnp.float32),
        ],
        compiler_params=pltpu.CompilerParams(
            # v7x: shard the batch grid across both TensorCores;
            # harmless no-op on single-TC v5e/v6e.
            dimension_semantics=("parallel",),
        ),
    )(flat(current), flat(last), flat(label), flat(nxt), flat(fake),
      flat(weight))

    # (B, 5, C, HW) -> (B, 5C, H, W) is a free view; component groups land in
    # exactly concat([current, last, label, instance, next], axis=1) order.
    encoder_input = enc5.reshape(B, 5 * C, H, W)
    fake_next = fake_next.reshape(B, C, H, W)
    # Decoder_input / instance are channel slices of the single 5C slab (the
    # 4C payload is written to HBM once). In production, pass the slab plus a
    # channel offset downstream instead of materializing these slices.
    decoder_input = encoder_input[:, : 4 * C]
    instance = encoder_input[:, 3 * C: 4 * C]

    # reparameterize: z = eps * exp(0.5*logvar) + mu.  mu/logvar/eps are tiny
    # (B, Z); a dedicated pallas_call is pure launch overhead, so plain jnp
    # (XLA-fused) per the performance review.
    z = eps * jnp.exp(0.5 * logvar) + mu

    return {
        "fake_next": fake_next,
        "Decoder_input": decoder_input,
        "Encoder_input": encoder_input,
        "instance": instance,
        "z": z,
    }


# --------------------------------------------------------------------------
# Pure-JAX reference for verification
# --------------------------------------------------------------------------
def get_edges_ref(t):
    dh = (t[:, :, :, 1:] != t[:, :, :, :-1]).astype(jnp.float32)
    dv = (t[:, :, 1:, :] != t[:, :, :-1, :]).astype(jnp.float32)
    e = jnp.zeros_like(t, dtype=jnp.float32)
    e = e.at[:, :, :, 1:].max(dh)
    e = e.at[:, :, :, :-1].max(dh)
    e = e.at[:, :, 1:, :].max(dv)
    e = e.at[:, :, :-1, :].max(dv)
    return e


if __name__ == "__main__":
    B, C, H, W, Z = 2, 4, 16, 16, 32
    key = jax.random.PRNGKey(0)
    ks = jax.random.split(key, 9)

    current = jax.random.normal(ks[0], (B, C, H, W), jnp.float32)
    last = jax.random.normal(ks[1], (B, C, H, W), jnp.float32)
    nxt = jax.random.normal(ks[2], (B, C, H, W), jnp.float32)
    # label: piecewise-constant (segmentation-style) integer-valued map
    label = jnp.floor(jax.random.uniform(ks[3], (B, C, H, W)) * 3.0).astype(jnp.float32)
    mu = jax.random.normal(ks[4], (B, Z), jnp.float32)
    logvar = jax.random.normal(ks[5], (B, Z), jnp.float32)
    eps = jax.random.normal(ks[6], (B, Z), jnp.float32)
    fake = jax.random.normal(ks[7], (B, C, H, W), jnp.float32)
    weight = jax.nn.sigmoid(jax.random.normal(ks[8], (B, 1, H, W), jnp.float32))

    fwd = jax.jit(scar_forward)
    out = fwd(current, last, nxt, label, mu, logvar, eps, fake, weight)
    jax.block_until_ready(out)

    # verify against pure-JAX references
    instance_ref = get_edges_ref(label)
    assert jnp.allclose(out["instance"], instance_ref), "edge mismatch"
    assert jnp.allclose(out["z"], eps * jnp.exp(0.5 * logvar) + mu, atol=1e-5), "reparam mismatch"
    assert jnp.allclose(
        out["fake_next"], fake * weight + (1.0 - weight) * current, atol=1e-5
    ), "blend mismatch"
    enc_ref = jnp.concatenate([current, last, label, instance_ref, nxt], axis=1)
    assert jnp.allclose(out["Encoder_input"], enc_ref), "encoder slab mismatch"
    assert jnp.allclose(out["Decoder_input"], enc_ref[:, : 4 * C]), "decoder slab mismatch"
    assert out["Decoder_input"].shape == (B, 4 * C, H, W)
    assert out["Encoder_input"].shape == (B, 5 * C, H, W)

    print("KERNEL_OK")
</pallas_src>

<mosaic_0001>
module attributes {stable_mosaic.version = 11 : i64} {
  func.func @_scar_fused_kernel(%arg0: i32, %arg1: memref<1x4x256xf32, #tpu.memory_space<vmem>>, %arg2: memref<1x4x256xf32, #tpu.memory_space<vmem>>, %arg3: memref<1x4x256xf32, #tpu.memory_space<vmem>>, %arg4: memref<1x4x256xf32, #tpu.memory_space<vmem>>, %arg5: memref<1x4x256xf32, #tpu.memory_space<vmem>>, %arg6: memref<1x1x256xf32, #tpu.memory_space<vmem>>, %arg7: memref<1x5x4x256xf32, #tpu.memory_space<vmem>>, %arg8: memref<1x4x256xf32, #tpu.memory_space<vmem>>) attributes {dimension_semantics = [#tpu.dimension_semantics<parallel>], iteration_bounds = array<i64: 2>, scalar_prefetch = 0 : i64, scratch_operands = 0 : i64, tpu.core_type = #tpu.core_type<tc>, window_params = [{transform_indices = @transform_0, window_bounds = array<i64: 1, 4, 256>}, {transform_indices = @transform_1, window_bounds = array<i64: 1, 4, 256>}, {transform_indices = @transform_2, window_bounds = array<i64: 1, 4, 256>}, {transform_indices = @transform_3, window_bounds = array<i64: 1, 4, 256>}, {transform_indices = @transform_4, window_bounds = array<i64: 1, 4, 256>}, {transform_indices = @transform_5, window_bounds = array<i64: 1, 1, 256>}, {transform_indices = @transform_6, window_bounds = array<i64: 1, 5, 4, 256>}, {transform_indices = @transform_7, window_bounds = array<i64: 1, 4, 256>}]} {
    %c0 = arith.constant 0 : index
    %c0_0 = arith.constant 0 : index
    %c0_1 = arith.constant 0 : index
    %0 = vector.load %arg1[%c0, %c0_0, %c0_1] : memref<1x4x256xf32, #tpu.memory_space<vmem>>, vector<1x4x256xf32>
    %1 = vector.shape_cast %0 : vector<1x4x256xf32> to vector<4x256xf32>
    %c0_2 = arith.constant 0 : index
    %c0_3 = arith.constant 0 : index
    %c0_4 = arith.constant 0 : index
    %2 = vector.load %arg2[%c0_2, %c0_3, %c0_4] : memref<1x4x256xf32, #tpu.memory_space<vmem>>, vector<1x4x256xf32>
    %3 = vector.shape_cast %2 : vector<1x4x256xf32> to vector<4x256xf32>
    %c0_5 = arith.constant 0 : index
    %c0_6 = arith.constant 0 : index
    %c0_7 = arith.constant 0 : index
    %4 = vector.load %arg3[%c0_5, %c0_6, %c0_7] : memref<1x4x256xf32, #tpu.memory_space<vmem>>, vector<1x4x256xf32>
    %5 = vector.shape_cast %4 : vector<1x4x256xf32> to vector<4x256xf32>
    %c0_8 = arith.constant 0 : index
    %c0_9 = arith.constant 0 : index
    %c0_10 = arith.constant 0 : index
    %6 = vector.load %arg4[%c0_8, %c0_9, %c0_10] : memref<1x4x256xf32, #tpu.memory_space<vmem>>, vector<1x4x256xf32>
    %7 = vector.shape_cast %6 : vector<1x4x256xf32> to vector<4x256xf32>
    %8 = tpu.iota {dimensions = array<i32: 1>} : vector<1x256xi32>
    %c16_i32 = arith.constant 16 : i32
    %c0_i32 = arith.constant 0 : i32
    %9 = arith.cmpi eq, %c16_i32, %c0_i32 : i32
    %c1_i32 = arith.constant 1 : i32
    %10 = arith.select %9, %c1_i32, %c16_i32 : i32
    %11 = vector.broadcast %10 : i32 to vector<1x256xi32>
    %12 = arith.remsi %8, %11 : vector<1x256xi32>
    %c0_i32_11 = arith.constant 0 : i32
    %13 = vector.broadcast %c0_i32_11 : i32 to vector<1x256xi32>
    %14 = arith.cmpi ne, %12, %13 : vector<1x256xi32>
    %c0_i32_12 = arith.constant 0 : i32
    %15 = vector.broadcast %c0_i32_12 : i32 to vector<1x256xi32>
    %16 = arith.cmpi slt, %12, %15 : vector<1x256xi32>
    %c0_i32_13 = arith.constant 0 : i32
    %17 = arith.cmpi slt, %10, %c0_i32_13 : i32
    %18 = vector.broadcast %17 : i1 to vector<1x256xi1>
    %19 = vector.broadcast %18 : vector<1x256xi1> to vector<1x256xi1>
    %20 = arith.xori %16, %19 : vector<1x256xi1>
    %21 = arith.andi %20, %14 : vector<1x256xi1>
    %22 = vector.broadcast %10 : i32 to vector<1x256xi32>
    %23 = arith.addi %12, %22 : vector<1x256xi32>
    %24 = arith.select %21, %23, %12 : vector<1x256xi1>, vector<1x256xi32>
    %c0_i32_14 = arith.constant 0 : i32
    %25 = vector.broadcast %c0_i32_14 : i32 to vector<1x256xi32>
    %26 = arith.cmpi sgt, %24, %25 : vector<1x256xi32>
    %c16_i32_15 = arith.constant 16 : i32
    %27 = vector.broadcast %c16_i32_15 : i32 to vector<1x256xi32>
    %28 = arith.cmpi sge, %8, %27 : vector<1x256xi32>
    %c1_i32_16 = arith.constant 1 : i32
    %29 = tpu.dynamic_rotate %5 by %c1_i32_16 dim 1 : vector<4x256xf32>, i32 -> vector<4x256xf32>
    %c16_i32_17 = arith.constant 16 : i32
    %30 = tpu.dynamic_rotate %5 by %c16_i32_17 dim 1 : vector<4x256xf32>, i32 -> vector<4x256xf32>
    %31 = arith.cmpf one, %5, %29 : vector<4x256xf32>
    %32 = vector.broadcast %26 : vector<1x256xi1> to vector<4x256xi1>
    %33 = arith.andi %31, %32 : vector<4x256xi1>
    %cst = arith.constant 1.000000e+00 : f32
    %cst_18 = arith.constant 0.000000e+00 : f32
    %34 = vector.broadcast %cst : f32 to vector<4x256xf32>
    %35 = vector.broadcast %cst_18 : f32 to vector<4x256xf32>
    %36 = arith.select %33, %34, %35 : vector<4x256xi1>, vector<4x256xf32>
    %37 = arith.cmpf one, %5, %30 : vector<4x256xf32>
    %38 = vector.broadcast %28 : vector<1x256xi1> to vector<4x256xi1>
    %39 = arith.andi %37, %38 : vector<4x256xi1>
    %cst_19 = arith.constant 1.000000e+00 : f32
    %cst_20 = arith.constant 0.000000e+00 : f32
    %40 = vector.broadcast %cst_19 : f32 to vector<4x256xf32>
    %41 = vector.broadcast %cst_20 : f32 to vector<4x256xf32>
    %42 = arith.select %39, %40, %41 : vector<4x256xi1>, vector<4x256xf32>
    %c255_i32 = arith.constant 255 : i32
    %43 = tpu.dynamic_rotate %36 by %c255_i32 dim 1 : vector<4x256xf32>, i32 -> vector<4x256xf32>
    %c240_i32 = arith.constant 240 : i32
    %44 = tpu.dynamic_rotate %42 by %c240_i32 dim 1 : vector<4x256xf32>, i32 -> vector<4x256xf32>
    %45 = arith.maximumf %36, %43 : vector<4x256xf32>
    %46 = arith.maximumf %42, %44 : vector<4x256xf32>
    %47 = arith.maximumf %45, %46 : vector<4x256xf32>
    %c0_21 = arith.constant 0 : index
    %c0_22 = arith.constant 0 : index
    %c0_23 = arith.constant 0 : index
    %c0_24 = arith.constant 0 : index
    %48 = vector.load %arg7[%c0_21, %c0_22, %c0_23, %c0_24] : memref<1x5x4x256xf32, #tpu.memory_space<vmem>>, vector<1x1x4x256xf32>
    %49 = vector.shape_cast %48 : vector<1x1x4x256xf32> to vector<4x256xf32>
    %50 = vector.shape_cast %1 : vector<4x256xf32> to vector<1x1x4x256xf32>
    tpu.vector_store %arg7[%c0_21, %c0_22, %c0_23, %c0_24], %50 {strides = array<i32>} : memref<1x5x4x256xf32, #tpu.memory_space<vmem>>, vector<1x1x4x256xf32>,
    %c0_25 = arith.constant 0 : index
    %c1 = arith.constant 1 : index
    %c0_26 = arith.constant 0 : index
    %c0_27 = arith.constant 0 : index
    %51 = vector.load %arg7[%c0_25, %c1, %c0_26, %c0_27] : memref<1x5x4x256xf32, #tpu.memory_space<vmem>>, vector<1x1x4x256xf32>
    %52 = vector.shape_cast %51 : vector<1x1x4x256xf32> to vector<4x256xf32>
    %53 = vector.shape_cast %3 : vector<4x256xf32> to vector<1x1x4x256xf32>
    tpu.vector_store %arg7[%c0_25, %c1, %c0_26, %c0_27], %53 {strides = array<i32>} : memref<1x5x4x256xf32, #tpu.memory_space<vmem>>, vector<1x1x4x256xf32>,
    %c0_28 = arith.constant 0 : index
    %c2 = arith.constant 2 : index
    %c0_29 = arith.constant 0 : index
    %c0_30 = arith.constant 0 : index
    %54 = vector.load %arg7[%c0_28, %c2, %c0_29, %c0_30] : memref<1x5x4x256xf32, #tpu.memory_space<vmem>>, vector<1x1x4x256xf32>
    %55 = vector.shape_cast %54 : vector<1x1x4x256xf32> to vector<4x256xf32>
    %56 = vector.shape_cast %5 : vector<4x256xf32> to vector<1x1x4x256xf32>
    tpu.vector_store %arg7[%c0_28, %c2, %c0_29, %c0_30], %56 {strides = array<i32>} : memref<1x5x4x256xf32, #tpu.memory_space<vmem>>, vector<1x1x4x256xf32>,
    %c0_31 = arith.constant 0 : index
    %c3 = arith.constant 3 : index
    %c0_32 = arith.constant 0 : index
    %c0_33 = arith.constant 0 : index
    %57 = vector.load %arg7[%c0_31, %c3, %c0_32, %c0_33] : memref<1x5x4x256xf32, #tpu.memory_space<vmem>>, vector<1x1x4x256xf32>
    %58 = vector.shape_cast %57 : vector<1x1x4x256xf32> to vector<4x256xf32>
    %59 = vector.shape_cast %47 : vector<4x256xf32> to vector<1x1x4x256xf32>
    tpu.vector_store %arg7[%c0_31, %c3, %c0_32, %c0_33], %59 {strides = array<i32>} : memref<1x5x4x256xf32, #tpu.memory_space<vmem>>, vector<1x1x4x256xf32>,
    %c0_34 = arith.constant 0 : index
    %c4 = arith.constant 4 : index
    %c0_35 = arith.constant 0 : index
    %c0_36 = arith.constant 0 : index
    %60 = vector.load %arg7[%c0_34, %c4, %c0_35, %c0_36] : memref<1x5x4x256xf32, #tpu.memory_space<vmem>>, vector<1x1x4x256xf32>
    %61 = vector.shape_cast %60 : vector<1x1x4x256xf32> to vector<4x256xf32>
    %62 = vector.shape_cast %7 : vector<4x256xf32> to vector<1x1x4x256xf32>
    tpu.vector_store %arg7[%c0_34, %c4, %c0_35, %c0_36], %62 {strides = array<i32>} : memref<1x5x4x256xf32, #tpu.memory_space<vmem>>, vector<1x1x4x256xf32>,
    %c0_37 = arith.constant 0 : index
    %c0_38 = arith.constant 0 : index
    %c0_39 = arith.constant 0 : index
    %63 = vector.load %arg6[%c0_37, %c0_38, %c0_39] : memref<1x1x256xf32, #tpu.memory_space<vmem>>, vector<1x1x256xf32>
    %64 = vector.shape_cast %63 : vector<1x1x256xf32> to vector<1x256xf32>
    %c0_40 = arith.constant 0 : index
    %c0_41 = arith.constant 0 : index
    %c0_42 = arith.constant 0 : index
    %65 = vector.load %arg5[%c0_40, %c0_41, %c0_42] : memref<1x4x256xf32, #tpu.memory_space<vmem>>, vector<1x4x256xf32>
    %66 = vector.shape_cast %65 : vector<1x4x256xf32> to vector<4x256xf32>
    %67 = vector.broadcast %64 : vector<1x256xf32> to vector<4x256xf32>
    %68 = arith.mulf %66, %67 : vector<4x256xf32>
    %cst_43 = arith.constant 1.000000e+00 : f32
    %69 = vector.broadcast %cst_43 : f32 to vector<1x256xf32>
    %70 = arith.subf %69, %64 : vector<1x256xf32>
    %71 = vector.broadcast %70 : vector<1x256xf32> to vector<4x256xf32>
    %72 = arith.mulf %71, %1 : vector<4x256xf32>
    %73 = arith.addf %68, %72 : vector<4x256xf32>
    %c0_44 = arith.constant 0 : index
    %c0_45 = arith.constant 0 : index
    %c0_46 = arith.constant 0 : index
    %74 = vector.load %arg8[%c0_44, %c0_45, %c0_46] : memref<1x4x256xf32, #tpu.memory_space<vmem>>, vector<1x4x256xf32>
    %75 = vector.shape_cast %74 : vector<1x4x256xf32> to vector<4x256xf32>
    %76 = vector.shape_cast %73 : vector<4x256xf32> to vector<1x4x256xf32>
    tpu.vector_store %arg8[%c0_44, %c0_45, %c0_46], %76 {strides = array<i32>} : memref<1x4x256xf32, #tpu.memory_space<vmem>>, vector<1x4x256xf32>,
    return
  }
  func.func @transform_0(%arg0: i32) -> (i32, i32, i32) {
    %c0_i32 = arith.constant 0 : i32
    %c0_i32_0 = arith.constant 0 : i32
    %c0_i32_1 = arith.constant 0 : i32
    return %arg0, %c0_i32, %c0_i32_0 : i32, i32, i32
  }
  func.func @transform_1(%arg0: i32) -> (i32, i32, i32) {
    %c0_i32 = arith.constant 0 : i32
    %c0_i32_0 = arith.constant 0 : i32
    %c0_i32_1 = arith.constant 0 : i32
    return %arg0, %c0_i32, %c0_i32_0 : i32, i32, i32
  }
  func.func @transform_2(%arg0: i32) -> (i32, i32, i32) {
    %c0_i32 = arith.constant 0 : i32
    %c0_i32_0 = arith.constant 0 : i32
    %c0_i32_1 = arith.constant 0 : i32
    return %arg0, %c0_i32, %c0_i32_0 : i32, i32, i32
  }
  func.func @transform_3(%arg0: i32) -> (i32, i32, i32) {
    %c0_i32 = arith.constant 0 : i32
    %c0_i32_0 = arith.constant 0 : i32
    %c0_i32_1 = arith.constant 0 : i32
    return %arg0, %c0_i32, %c0_i32_0 : i32, i32, i32
  }
  func.func @transform_4(%arg0: i32) -> (i32, i32, i32) {
    %c0_i32 = arith.constant 0 : i32
    %c0_i32_0 = arith.constant 0 : i32
    %c0_i32_1 = arith.constant 0 : i32
    return %arg0, %c0_i32, %c0_i32_0 : i32, i32, i32
  }
  func.func @transform_5(%arg0: i32) -> (i32, i32, i32) {
    %c0_i32 = arith.constant 0 : i32
    %c0_i32_0 = arith.constant 0 : i32
    %c0_i32_1 = arith.constant 0 : i32
    return %arg0, %c0_i32, %c0_i32_0 : i32, i32, i32
  }
  func.func @transform_6(%arg0: i32) -> (i32, i32, i32, i32) {
    %c0_i32 = arith.constant 0 : i32
    %c0_i32_0 = arith.constant 0 : i32
    %c0_i32_1 = arith.constant 0 : i32
    %c0_i32_2 = arith.constant 0 : i32
    return %arg0, %c0_i32, %c0_i32_0, %c0_i32_1 : i32, i32, i32, i32
  }
  func.func @transform_7(%arg0: i32) -> (i32, i32, i32) {
    %c0_i32 = arith.constant 0 : i32
    %c0_i32_0 = arith.constant 0 : i32
    %c0_i32_1 = arith.constant 0 : i32
    return %arg0, %c0_i32, %c0_i32_0 : i32, i32, i32
  }
}

</mosaic_0001>

<llo_original>
// kernel: scar_forward.1
$region0: #{scar_forward.1}
  #allocation0 [shape = 'u32[]', space=smem, size = 0x4, offset = 0x4, fixed_abs, tag = 'smem constant byte address 0x4 - core index']
  #allocation1 [shape = 'u32[144,128]{1,0:T(1,128)}', space=vmem, size = 0x12000, scoped, tag = 'internal scratch']
  %s0 = inlined_call_operand.vmem [shape: f32[2,4,256], index: 0, kind: input, shape index: {}]
  %s1 = inlined_call_operand.vmem [shape: f32[2,4,256], index: 1, kind: input, shape index: {}]
  %s2 = inlined_call_operand.vmem [shape: f32[2,4,256], index: 2, kind: input, shape index: {}]
  %s3 = inlined_call_operand.vmem [shape: f32[2,4,256], index: 3, kind: input, shape index: {}]
  %s4 = inlined_call_operand.vmem [shape: f32[2,4,256], index: 4, kind: input, shape index: {}]
  %s5 = inlined_call_operand.vmem [shape: f32[2,1,256], index: 5, kind: input, shape index: {}]
  %s6 = inlined_call_operand.vmem [shape: f32[2,5,4,256], index: 6, kind: output, shape index: {0}]
  %s7 = inlined_call_operand.vmem [shape: f32[2,4,256], index: 7, kind: output, shape index: {1}]
  %8 = xla_tuple %s6, %s7
  %s9 = sld [smem:[#allocation0]]
  $region65: #{scar_forward.1} parent=0
    _
  %s11 = ssub.s32 1, %s9
  %s12 = scalar_select 0, %s11, %s9
  loop: start=0, step=1, limit=4
  $region2: #{scar_forward.1} parent=0 // loop_pre_header
    _
  $region3: #{scar_forward.1} parent=0 // loop_header
    %s14 = sphi 0, %s18
    %p15 = scmp.ge.s32.totalorder %s14, 4
    %s24 = sphi 0, %s26
    %s27 = sphi 0, %s24
    %s28 = sphi 0, %s27
    %s44 = sphi 0, %s28
    %s50 = sphi 0, %s52
    %s53 = sphi 0, %s50
    %s54 = sphi 0, %s53
    %s70 = sphi 0, %s54
    %s76 = sphi 0, %s78
    %s79 = sphi 0, %s76
    %s80 = sphi 0, %s79
    %s96 = sphi 0, %s80
    %s102 = sphi 0, %s104
    %s105 = sphi 0, %s102
    %s106 = sphi 0, %s105
    %s122 = sphi 0, %s106
    %s128 = sphi 0, %s130
    %s131 = sphi 0, %s128
    %s132 = sphi 0, %s131
    %s148 = sphi 0, %s132
    %s154 = sphi 0, %s156
    %s157 = sphi 0, %s154
    %s158 = sphi 0, %s157
    %s174 = sphi 0, %s158
    %s180 = sphi 0, %s182
    %s183 = sphi 0, %s180
    %s184 = sphi 0, %s183
    %s200 = sphi 0, %s184
    %s206 = sphi 0, %s208
    %s209 = sphi 0, %s206
    %s210 = sphi 0, %s209
    %s226 = sphi 0, %s210
  $region4: #{scar_forward.1} parent=0 // loop_header_branch
    %17 = sbr.rel (%p15) target = $region8
  $region5: #{scar_forward.1} parent=0 // loop_body
    %s19 = ssub.s32 %s14, 1
    %s20 = ssub.s32 %s14, 2
    %s21 = sadd.s32 %s14, 1
    %s22 = ssub.s32 %s14, %s21
    %p23 = scmp.eq.s32.totalorder %s22, 0
    %s25 = sadd.s32 %s24, 1
    %s26 = scalar_select %p23, %s24, %s25
    %p29 = pneg %p23
    %p30 = scmp.eq.s32.totalorder %s14, 1
    %p31 = por %p29, %p30
    %p32 = scmp.ne.s32.totalorder %s24, %s27
    %p33 = scmp.eq.s32.totalorder %s14, 0
    %p34 = por %p32, %p33
    %p35 = scmp.ne.s32.totalorder %s24, %s27
    %p36 = scmp.eq.s32.totalorder %s19, 1
    %p37 = por %p35, %p36
    %p38 = scmp.ne.s32.totalorder %s27, %s28
    %p39 = scmp.eq.s32.totalorder %s19, 0
    %p40 = por %p38, %p39
    %p41 = scmp.ne.s32.totalorder %s27, %s28
    %p42 = scmp.eq.s32.totalorder %s20, 1
    %p43 = por %p41, %p42
    %p45 = scmp.ne.s32.totalorder %s28, %s44
    %p46 = scmp.eq.s32.totalorder %s20, 0
    %p47 = por %p45, %p46
    %s48 = ssub.s32 %s14, %s21
    %p49 = scmp.eq.s32.totalorder %s48, 0
    %s51 = sadd.s32 %s50, 1
    %s52 = scalar_select %p49, %s50, %s51
    %p55 = pneg %p49
    %p56 = scmp.eq.s32.totalorder %s14, 1
    %p57 = por %p55, %p56
    %p58 = scmp.ne.s32.totalorder %s50, %s53
    %p59 = scmp.eq.s32.totalorder %s14, 0
    %p60 = por %p58, %p59
    %p61 = scmp.ne.s32.totalorder %s50, %s53
    %p62 = scmp.eq.s32.totalorder %s19, 1
    %p63 = por %p61, %p62
    %p64 = scmp.ne.s32.totalorder %s53, %s54
    %p65 = scmp.eq.s32.totalorder %s19, 0
    %p66 = por %p64, %p65
    %p67 = scmp.ne.s32.totalorder %s53, %s54
    %p68 = scmp.eq.s32.totalorder %s20, 1
    %p69 = por %p67, %p68
    %p71 = scmp.ne.s32.totalorder %s54, %s70
    %p72 = scmp.eq.s32.totalorder %s20, 0
    %p73 = por %p71, %p72
    %s74 = ssub.s32 %s14, %s21
    %p75 = scmp.eq.s32.totalorder %s74, 0
    %s77 = sadd.s32 %s76, 1
    %s78 = scalar_select %p75, %s76, %s77
    %p81 = pneg %p75
    %p82 = scmp.eq.s32.totalorder %s14, 1
    %p83 = por %p81, %p82
    %p84 = scmp.ne.s32.totalorder %s76, %s79
    %p85 = scmp.eq.s32.totalorder %s14, 0
    %p86 = por %p84, %p85
    %p87 = scmp.ne.s32.totalorder %s76, %s79
    %p88 = scmp.eq.s32.totalorder %s19, 1
    %p89 = por %p87, %p88
    %p90 = scmp.ne.s32.totalorder %s79, %s80
    %p91 = scmp.eq.s32.totalorder %s19, 0
    %p92 = por %p90, %p91
    %p93 = scmp.ne.s32.totalorder %s79, %s80
    %p94 = scmp.eq.s32.totalorder %s20, 1
    %p95 = por %p93, %p94
    %p97 = scmp.ne.s32.totalorder %s80, %s96
    %p98 = scmp.eq.s32.totalorder %s20, 0
    %p99 = por %p97, %p98
    %s100 = ssub.s32 %s14, %s21
    %p101 = scmp.eq.s32.totalorder %s100, 0
    %s103 = sadd.s32 %s102, 1
    %s104 = scalar_select %p101, %s102, %s103
    %p107 = pneg %p101
    %p108 = scmp.eq.s32.totalorder %s14, 1
    %p109 = por %p107, %p108
    %p110 = scmp.ne.s32.totalorder %s102, %s105
    %p111 = scmp.eq.s32.totalorder %s14, 0
    %p112 = por %p110, %p111
    %p113 = scmp.ne.s32.totalorder %s102, %s105
    %p114 = scmp.eq.s32.totalorder %s19, 1
    %p115 = por %p113, %p114
    %p116 = scmp.ne.s32.totalorder %s105, %s106
    %p117 = scmp.eq.s32.totalorder %s19, 0
    %p118 = por %p116, %p117
    %p119 = scmp.ne.s32.totalorder %s105, %s106
    %p120 = scmp.eq.s32.totalorder %s20, 1
    %p121 = por %p119, %p120
    %p123 = scmp.ne.s32.totalorder %s106, %s122
    %p124 = scmp.eq.s32.totalorder %s20, 0
    %p125 = por %p123, %p124
    %s126 = ssub.s32 %s14, %s21
    %p127 = scmp.eq.s32.totalorder %s126, 0
    %s129 = sadd.s32 %s128, 1
    %s130 = scalar_select %p127, %s128, %s129
    %p133 = pneg %p127
    %p134 = scmp.eq.s32.totalorder %s14, 1
    %p135 = por %p133, %p134
    %p136 = scmp.ne.s32.totalorder %s128, %s131
    %p137 = scmp.eq.s32.totalorder %s14, 0
    %p138 = por %p136, %p137
    %p139 = scmp.ne.s32.totalorder %s128, %s131
    %p140 = scmp.eq.s32.totalorder %s19, 1
    %p141 = por %p139, %p140
    %p142 = scmp.ne.s32.totalorder %s131, %s132
    %p143 = scmp.eq.s32.totalorder %s19, 0
    %p144 = por %p142, %p143
    %p145 = scmp.ne.s32.totalorder %s131, %s132
    %p146 = scmp.eq.s32.totalorder %s20, 1
    %p147 = por %p145, %p146
    %p149 = scmp.ne.s32.totalorder %s132, %s148
    %p150 = scmp.eq.s32.totalorder %s20, 0
    %p151 = por %p149, %p150
    %s152 = ssub.s32 %s14, %s21
    %p153 = scmp.eq.s32.totalorder %s152, 0
    %s155 = sadd.s32 %s154, 1
    %s156 = scalar_select %p153, %s154, %s155
    %p159 = pneg %p153
    %p160 = scmp.eq.s32.totalorder %s14, 1
    %p161 = por %p159, %p160
    %p162 = scmp.ne.s32.totalorder %s154, %s157
    %p163 = scmp.eq.s32.totalorder %s14, 0
    %p164 = por %p162, %p163
    %p165 = scmp.ne.s32.totalorder %s154, %s157
    %p166 = scmp.eq.s32.totalorder %s19, 1
    %p167 = por %p165, %p166
    %p168 = scmp.ne.s32.totalorder %s157, %s158
    %p169 = scmp.eq.s32.totalorder %s19, 0
    %p170 = por %p168, %p169
    %p171 = scmp.ne.s32.totalorder %s157, %s158
    %p172 = scmp.eq.s32.totalorder %s20, 1
    %p173 = por %p171, %p172
    %p175 = scmp.ne.s32.totalorder %s158, %s174
    %p176 = scmp.eq.s32.totalorder %s20, 0
    %p177 = por %p175, %p176
    %s178 = ssub.s32 %s14, %s21
    %p179 = scmp.eq.s32.totalorder %s178, 0
    %s181 = sadd.s32 %s180, 1
    %s182 = scalar_select %p179, %s180, %s181
    %p185 = pneg %p179
    %p186 = scmp.eq.s32.totalorder %s14, 1
    %p187 = por %p185, %p186
    %p188 = scmp.ne.s32.totalorder %s180, %s183
    %p189 = scmp.eq.s32.totalorder %s14, 0
    %p190 = por %p188, %p189
    %p191 = scmp.ne.s32.totalorder %s180, %s183
    %p192 = scmp.eq.s32.totalorder %s19, 1
    %p193 = por %p191, %p192
    %p194 = scmp.ne.s32.totalorder %s183, %s184
    %p195 = scmp.eq.s32.totalorder %s19, 0
    %p196 = por %p194, %p195
    %p197 = scmp.ne.s32.totalorder %s183, %s184
    %p198 = scmp.eq.s32.totalorder %s20, 1
    %p199 = por %p197, %p198
    %p201 = scmp.ne.s32.totalorder %s184, %s200
    %p202 = scmp.eq.s32.totalorder %s20, 0
    %p203 = por %p201, %p202
    %s204 = ssub.s32 %s14, %s21
    %p205 = scmp.eq.s32.totalorder %s204, 0
    %s207 = sadd.s32 %s206, 1
    %s208 = scalar_select %p205, %s206, %s207
    %p211 = pneg %p205
    %p212 = scmp.eq.s32.totalorder %s14, 1
    %p213 = por %p211, %p212
    %p214 = scmp.ne.s32.totalorder %s206, %s209
    %p215 = scmp.eq.s32.totalorder %s14, 0
    %p216 = por %p214, %p215
    %p217 = scmp.ne.s32.totalorder %s206, %s209
    %p218 = scmp.eq.s32.totalorder %s19, 1
    %p219 = por %p217, %p218
    %p220 = scmp.ne.s32.totalorder %s209, %s210
    %p221 = scmp.eq.s32.totalorder %s19, 0
    %p222 = por %p220, %p221
    %p223 = scmp.ne.s32.totalorder %s209, %s210
    %p224 = scmp.eq.s32.totalorder %s20, 1
    %p225 = por %p223, %p224
    %p227 = scmp.ne.s32.totalorder %s210, %s226
    %p228 = scmp.eq.s32.totalorder %s20, 0
    %p229 = por %p227, %p228
    %p230 = scmp.le.s32.totalorder 1, %s14
    %p231 = scmp.lt.s32.totalorder %s14, 3
    %p232 = pnand %p230, %p231
    %p233 = pneg %p232
    // Predicated region
    $region9: #{scar_forward.1} parent=5 // pred_check
      _
    $region10: #{scar_forward.1} parent=5 // pred_check_branch
      %235 = sbr.rel (%p232) target = $region12
    $region11: #{scar_forward.1} parent=5 // pred_region
      %s236 = ssub.s32 %s14, 1
    $region12: #{scar_forward.1} parent=5 // pred_fallthru
      _
    %p237 = scmp.lt.s32.totalorder %s14, 2
    // Predicated region
    $region13: #{scar_forward.1} parent=5 // pred_check
      %p238 = pneg %p237
    $region14: #{scar_forward.1} parent=5 // pred_check_branch
      %240 = sbr.rel (%p238) target = $region16
    $region15: #{scar_forward.1} parent=5 // pred_region
      // Predicated region
      $region17: #{scar_forward.1} parent=15 // pred_check
        %p241 = pneg %p34
      $region18: #{scar_forward.1} parent=15 // pred_check_branch
        %243 = sbr.rel (%p241) target = $region20
      $region19: #{scar_forward.1} parent=15 // pred_region
        %p244 = scmp.lt.s32.totalorder %s14, 1
        %s245 = scalar_select %p244, %s14, 1
        %s246 = smul.addr %s245, 2
        %s247 = smul.addr %s246, 4
        %s248 = scalar_lea.vmem %s0, %s247
      $region20: #{scar_forward.1} parent=15 // pred_fallthru
        _
      // Predicated region
      $region21: #{scar_forward.1} parent=15 // pred_check
        %p249 = pneg %p60
      $region22: #{scar_forward.1} parent=15 // pred_check_branch
        %251 = sbr.rel (%p249) target = $region24
      $region23: #{scar_forward.1} parent=15 // pred_region
        %p252 = scmp.lt.s32.totalorder %s14, 1
        %s253 = scalar_select %p252, %s14, 1
        %s254 = smul.addr %s253, 2
        %s255 = smul.addr %s254, 4
        %s256 = scalar_lea.vmem %s1, %s255
      $region24: #{scar_forward.1} parent=15 // pred_fallthru
        _
      // Predicated region
      $region25: #{scar_forward.1} parent=15 // pred_check
        %p257 = pneg %p86
      $region26: #{scar_forward.1} parent=15 // pred_check_branch
        %259 = sbr.rel (%p257) target = $region28
      $region27: #{scar_forward.1} parent=15 // pred_region
        %p260 = scmp.lt.s32.totalorder %s14, 1
        %s261 = scalar_select %p260, %s14, 1
        %s262 = smul.addr %s261, 2
        %s263 = smul.addr %s262, 4
        %s264 = scalar_lea.vmem %s2, %s263
      $region28: #{scar_forward.1} parent=15 // pred_fallthru
        _
      // Predicated region
      $region29: #{scar_forward.1} parent=15 // pred_check
        %p265 = pneg %p112
      $region30: #{scar_forward.1} parent=15 // pred_check_branch
        %267 = sbr.rel (%p265) target = $region32
      $region31: #{scar_forward.1} parent=15 // pred_region
        %p268 = scmp.lt.s32.totalorder %s14, 1
        %s269 = scalar_select %p268, %s14, 1
        %s270 = smul.addr %s269, 2
        %s271 = smul.addr %s270, 4
        %s272 = scalar_lea.vmem %s3, %s271
      $region32: #{scar_forward.1} parent=15 // pred_fallthru
        _
      // Predicated region
      $region33: #{scar_forward.1} parent=15 // pred_check
        %p273 = pneg %p138
      $region34: #{scar_forward.1} parent=15 // pred_check_branch
        %275 = sbr.rel (%p273) target = $region36
      $region35: #{scar_forward.1} parent=15 // pred_region
        %p276 = scmp.lt.s32.totalorder %s14, 1
        %s277 = scalar_select %p276, %s14, 1
        %s278 = smul.addr %s277, 2
        %s279 = smul.addr %s278, 4
        %s280 = scalar_lea.vmem %s4, %s279
      $region36: #{scar_forward.1} parent=15 // pred_fallthru
        _
      // Predicated region
      $region37: #{scar_forward.1} parent=15 // pred_check
        %p281 = pneg %p164
      $region38: #{scar_forward.1} parent=15 // pred_check_branch
        %283 = sbr.rel (%p281) target = $region40
      $region39: #{scar_forward.1} parent=15 // pred_region
        %p284 = scmp.lt.s32.totalorder %s14, 1
        %s285 = scalar_select %p284, %s14, 1
        %s286 = smul.addr %s285, 2
        %s287 = scalar_lea.vmem %s5, %s286
      $region40: #{scar_forward.1} parent=15 // pred_fallthru
        _
    $region16: #{scar_forward.1} parent=5 // pred_fallthru
      _
    %p288 = scmp.le.s32.totalorder 1, %s14
    %p289 = scmp.lt.s32.totalorder %s14, 3
    %p290 = pnand %p288, %p289
    %p291 = pneg %p290
    // Predicated region
    $region41: #{scar_forward.1} parent=5 // pred_check
      _
    $region42: #{scar_forward.1} parent=5 // pred_check_branch
      %293 = sbr.rel (%p290) target = $region44
    $region43: #{scar_forward.1} parent=5 // pred_region
      %s294 = ssub.s32 %s14, 1
      %p295 = scmp.lt.s32.totalorder %s19, 1
      %s296 = scalar_select %p295, %s19, 1
      %s297 = smul.addr %s296, 2
      %s298 = smul.addr %s297, 4
      %s299 = scalar_lea.vmem %s0, %s298
      %p300 = pneg %p40
      %p301 = pneg %p37
      %p302 = scmp.lt.s32.totalorder %s19, 1
      %s303 = scalar_select %p302, %s19, 1
      %s304 = smul.addr %s303, 2
      %s305 = smul.addr %s304, 4
      %s306 = scalar_lea.vmem %s1, %s305
      %p307 = pneg %p66
      %p308 = pneg %p63
      %p309 = scmp.lt.s32.totalorder %s19, 1
      %s310 = scalar_select %p309, %s19, 1
      %s311 = smul.addr %s310, 2
      %s312 = smul.addr %s311, 4
      %s313 = scalar_lea.vmem %s2, %s312
      %p314 = pneg %p92
      %p315 = pneg %p89
      %p316 = scmp.lt.s32.totalorder %s19, 1
      %s317 = scalar_select %p316, %s19, 1
      %s318 = smul.addr %s317, 2
      %s319 = smul.addr %s318, 4
      %s320 = scalar_lea.vmem %s3, %s319
      %p321 = pneg %p118
      %p322 = pneg %p115
      %p323 = scmp.lt.s32.totalorder %s19, 1
      %s324 = scalar_select %p323, %s19, 1
      %s325 = smul.addr %s324, 2
      %s326 = smul.addr %s325, 4
      %s327 = scalar_lea.vmem %s4, %s326
      %p328 = pneg %p144
      %p329 = pneg %p141
      %p330 = scmp.lt.s32.totalorder %s19, 1
      %s331 = scalar_select %p330, %s19, 1
      %s332 = smul.addr %s331, 2
      %s333 = scalar_lea.vmem %s5, %s332
      %p334 = pneg %p170
      %p335 = pneg %p167
      %p336 = pneg %p196
      %p337 = pneg %p193
      %p338 = scmp.lt.s32.totalorder %s19, 1
      %s339 = scalar_select %p338, %s19, 1
      %s340 = smul.addr %s339, 10
      %s341 = smul.addr %s340, 4
      %s342 = scalar_lea.vmem %s6, %s341
      %p343 = pneg %p222
      %p344 = pneg %p219
      %p345 = scmp.lt.s32.totalorder %s19, 1
      %s346 = scalar_select %p345, %s19, 1
      %s347 = smul.addr %s346, 2
      %s348 = smul.addr %s347, 4
      %s349 = scalar_lea.vmem %s7, %s348
      %p350 = scmp.lt.s32.totalorder %s19, 1
      %s351 = scalar_select %p350, %s19, 1
      %s352 = smul.addr %s351, 2
      %s353 = smul.addr %s352, 4
      %s354 = scalar_lea.vmem %s0, %s353
      %p355 = scmp.lt.s32.totalorder %s19, 1
      %s356 = scalar_select %p355, %s19, 1
      %s357 = smul.addr %s356, 2
      %s358 = smul.addr %s357, 4
      %s359 = scalar_lea.vmem %s1, %s358
      %p360 = scmp.lt.s32.totalorder %s19, 1
      %s361 = scalar_select %p360, %s19, 1
      %s362 = smul.addr %s361, 2
      %s363 = smul.addr %s362, 4
      %s364 = scalar_lea.vmem %s2, %s363
      %p365 = scmp.lt.s32.totalorder %s19, 1
      %s366 = scalar_select %p365, %s19, 1
      %s367 = smul.addr %s366, 2
      %s368 = smul.addr %s367, 4
      %s369 = scalar_lea.vmem %s3, %s368
      %p370 = scmp.lt.s32.totalorder %s19, 1
      %s371 = scalar_select %p370, %s19, 1
      %s372 = smul.addr %s371, 2
      %s373 = smul.addr %s372, 4
      %s374 = scalar_lea.vmem %s4, %s373
      %p375 = scmp.lt.s32.totalorder %s19, 1
      %s376 = scalar_select %p375, %s19, 1
      %s377 = smul.addr %s376, 2
      %s378 = scalar_lea.vmem %s5, %s377
      %p379 = scmp.lt.s32.totalorder %s19, 1
      %s380 = scalar_select %p379, %s19, 1
      %s381 = smul.addr %s380, 10
      %s382 = smul.addr %s381, 4
      %s383 = scalar_lea.vmem %s6, %s382
      %p384 = scmp.lt.s32.totalorder %s19, 1
      %s385 = scalar_select %p384, %s19, 1
      %s386 = smul.addr %s385, 2
      %s387 = smul.addr %s386, 4
      %s388 = scalar_lea.vmem %s7, %s387
      %v389 = vld [vmem:[%s354] sm:$0xff]
      %v390 = vld [vmem:[%s359] sm:$0xff]
      %v391 = vld [vmem:[%s364] sm:$0xff]
      %v392 = vld [vmem:[%s369] sm:$0xff]
      %v393 = vlaneseq
      %v394 = vand.u32 %v393, 127
      %v395 = vadd.s32 %v394, 128
      %vm396 = vcmp.lt.s32.totalorder %v394, 0
      %v397 = vsub.s32 0, %v394
      %v398 = vsel %vm396, %v397, %v394
      %v399 = vshrl.u32 %v398, 4
      %v400 = vand.u32 %v398, 15
      %v401 = vsub.s32 0, %v400
      %v402 = vsel %vm396, %v401, %v400
      %vm403 = vcmp.lt.s32.totalorder %v395, 0
      %v404 = vsub.s32 0, %v395
      %v405 = vsel %vm403, %v404, %v395
      %v406 = vshrl.u32 %v405, 4
      %v407 = vand.u32 %v405, 15
      %v408 = vsub.s32 0, %v407
      %v409 = vsel %vm403, %v408, %v407
      %vm410 = vcmp.ne.s32.totalorder %v402, 0
      %vm411 = vcmp.ne.s32.totalorder %v409, 0
      %vm412 = vcmp.lt.s32.totalorder %v402, 0
      %vm413 = vcmp.lt.s32.totalorder %v409, 0
      %vm414 = vmand %vm412, %vm410
      %vm415 = vmand %vm413, %vm411
      %v416 = vadd.s32 %v402, 16
      %v417 = vadd.s32 %v409, 16
      %v418 = vsel %vm414, %v416, %v402
      %v419 = vsel %vm415, %v417, %v409
      %vm420 = vcmp.gt.s32.totalorder %v418, 0
      %vm421 = vcmp.gt.s32.totalorder %v419, 0
      %vm422 = vcmp.ge.s32.totalorder %v394, 16
      %vm423 = vcmp.ge.s32.totalorder %v395, 16
      %v425 = vcombine.high %v391, %v391
      %427 = vrot.lane.b32.xlu0 %v391, 1
      %v428 = vpop.permute.xlu0 %427
      %429 = vrot.lane.b32.xlu0 %v425, 1
      %v430 = vpop.permute.xlu0 %429
      %vm431 = vcmp.lt.s32.totalorder %v394, 1
      %v432 = vsel %vm431, %v428, %v430
      %v433 = vsel %vm431, %v430, %v428
      %434 = vrot.lane.b32.xlu0 %v391, 16
      %v435 = vpop.permute.xlu0 %434
      %436 = vrot.lane.b32.xlu0 %v425, 16
      %v437 = vpop.permute.xlu0 %436
      %vm438 = vcmp.lt.s32.totalorder %v394, 16
      %v439 = vsel %vm438, %v435, %v437
      %v440 = vsel %vm438, %v437, %v435
      %v443 = vcombine.low %v433, %v432
      %vm445 = vcmp.ne.f32.partialorder %v391, %v443
      %v446 = vsel %vm420, 1, 0
      %v447 = vsel %vm421, 1, 0
      %vm448 = vcmp.eq.s32.totalorder %v446, 1
      %vm449 = vcmp.eq.s32.totalorder %v447, 1
      %v450 = vsel %vm448, 1, 0
      %v451 = vsel %vm449, 1, 0
      %v452 = vcombine.low %v450, %v451
      %vm453 = vcmp.ne.s32.totalorder %v452, 0
      %vm454 = vmand %vm445, %vm453
      %v455 = vsel %vm454, 1.0, 0.0
      %v458 = vcombine.low %v440, %v439
      %vm460 = vcmp.ne.f32.partialorder %v391, %v458
      %v461 = vsel %vm422, 1, 0
      %v462 = vsel %vm423, 1, 0
      %vm463 = vcmp.eq.s32.totalorder %v461, 1
      %vm464 = vcmp.eq.s32.totalorder %v462, 1
      %v465 = vsel %vm463, 1, 0
      %v466 = vsel %vm464, 1, 0
      %v467 = vcombine.low %v465, %v466
      %vm468 = vcmp.ne.s32.totalorder %v467, 0
      %vm469 = vmand %vm460, %vm468
      %v470 = vsel %vm469, 1.0, 0.0
      %v472 = vcombine.high %v455, %v455
      %474 = vrot.lane.b32.xlu0 %v455, 127
      %v475 = vpop.permute.xlu0 %474
      %476 = vrot.lane.b32.xlu0 %v472, 127
      %v477 = vpop.permute.xlu0 %476
      %vm478 = vcmp.lt.s32.totalorder %v394, 127
      %v479 = vsel %vm478, %v475, %v477
      %v480 = vsel %vm478, %v477, %v475
      %v482 = vcombine.high %v470, %v470
      %484 = vrot.lane.b32.xlu0 %v470, 112
      %v485 = vpop.permute.xlu0 %484
      %486 = vrot.lane.b32.xlu0 %v482, 112
      %v487 = vpop.permute.xlu0 %486
      %vm488 = vcmp.lt.s32.totalorder %v394, 112
      %v489 = vsel %vm488, %v485, %v487
      %v490 = vsel %vm488, %v487, %v485
      %v493 = vcombine.low %v479, %v480
      %v495 = vmax.f32 %v455, %v493
      %v498 = vcombine.low %v489, %v490
      %v500 = vmax.f32 %v470, %v498
      %v501 = vmax.f32 %v495, %v500
      %502 = vst [vmem:[%s383] sm:$0xff] %v389
      %s503 = scalar_lea.vmem %s383, 8
      %504 = vst [vmem:[%s503] sm:$0xff] %v390
      %s505 = scalar_lea.vmem %s383, 16
      %506 = vst [vmem:[%s505] sm:$0xff] %v391
      %s507 = scalar_lea.vmem %s383, 24
      %508 = vst [vmem:[%s507] sm:$0xff] %v501
      %s509 = scalar_lea.vmem %s383, 32
      %510 = vst [vmem:[%s509] sm:$0xff] %v392
      %v511 = vld [vmem:[%s378] sm:$0x3]
      %v512 = vld [vmem:[%s374] sm:$0xff]
      %v514 = vlaneseq
      %v515 = vshrl.u32 %v514, 7
      %v516 = vsub.s32 0, %v515
      %v517 = vrot.slane %v511, %v516
      %v518 = vlaneseq
      %v519 = vshrl.u32 %v518, 7
      %v520 = vsub.s32 1, %v519
      %v521 = vrot.slane %v511, %v520
      %v522 = vcombine.low %v517, %v521
      %v524 = vmul.f32 %v512, %v522
      %v525 = vsub.f32 1.0, %v511
      %v527 = vlaneseq
      %v528 = vshrl.u32 %v527, 7
      %v529 = vsub.s32 0, %v528
      %v530 = vrot.slane %v525, %v529
      %v531 = vlaneseq
      %v532 = vshrl.u32 %v531, 7
      %v533 = vsub.s32 1, %v532
      %v534 = vrot.slane %v525, %v533
      %v538 = vcombine.high %v389, %v389
      %v540 = vmul.f32 %v530, %v389
      %v541 = vmul.f32 %v534, %v538
      %v544 = vcombine.low %v540, %v541
      %v546 = vadd.f32 %v524, %v544
      %547 = vst [vmem:[%s388] sm:$0xff] %v546
      %p548 = scmp.lt.s32.totalorder %s19, 1
      %s549 = scalar_select %p548, %s19, 1
      %s550 = smul.addr %s549, 10
      %s551 = smul.addr %s550, 4
      %s552 = scalar_lea.vmem %s6, %s551
      %p553 = scmp.lt.s32.totalorder %s19, 1
      %s554 = scalar_select %p553, %s19, 1
      %s555 = smul.addr %s554, 2
      %s556 = smul.addr %s555, 4
      %s557 = scalar_lea.vmem %s7, %s556
      // Predicated region
      $region45: #{scar_forward.1} parent=43 // pred_check
        %p558 = pneg %p193
      $region46: #{scar_forward.1} parent=43 // pred_check_branch
        %560 = sbr.rel (%p558) target = $region48
      $region47: #{scar_forward.1} parent=43 // pred_region
        _
      $region48: #{scar_forward.1} parent=43 // pred_fallthru
        _
      // Predicated region
      $region49: #{scar_forward.1} parent=43 // pred_check
        %p561 = pneg %p219
      $region50: #{scar_forward.1} parent=43 // pred_check_branch
        %563 = sbr.rel (%p561) target = $region52
      $region51: #{scar_forward.1} parent=43 // pred_region
        _
      $region52: #{scar_forward.1} parent=43 // pred_fallthru
        _
    $region44: #{scar_forward.1} parent=5 // pred_fallthru
      _
    %p564 = scmp.le.s32.totalorder 2, %s14
    // Predicated region
    $region53: #{scar_forward.1} parent=5 // pred_check
      %p565 = pneg %p564
    $region54: #{scar_forward.1} parent=5 // pred_check_branch
      %567 = sbr.rel (%p565) target = $region56
    $region55: #{scar_forward.1} parent=5 // pred_region
      %s568 = ssub.s32 %s14, 2
      // Predicated region
      $region57: #{scar_forward.1} parent=55 // pred_check
        %p569 = pneg %p199
      $region58: #{scar_forward.1} parent=55 // pred_check_branch
        %571 = sbr.rel (%p569) target = $region60
      $region59: #{scar_forward.1} parent=55 // pred_region
        %p572 = scmp.lt.s32.totalorder %s20, 1
        %s573 = scalar_select %p572, %s20, 1
        %s574 = smul.addr %s573, 10
        %s575 = smul.addr %s574, 4
        %s576 = scalar_lea.vmem %s6, %s575
      $region60: #{scar_forward.1} parent=55 // pred_fallthru
        _
      // Predicated region
      $region61: #{scar_forward.1} parent=55 // pred_check
        %p577 = pneg %p225
      $region62: #{scar_forward.1} parent=55 // pred_check_branch
        %579 = sbr.rel (%p577) target = $region64
      $region63: #{scar_forward.1} parent=55 // pred_region
        %p580 = scmp.lt.s32.totalorder %s20, 1
        %s581 = scalar_select %p580, %s20, 1
        %s582 = smul.addr %s581, 2
        %s583 = smul.addr %s582, 4
        %s584 = scalar_lea.vmem %s7, %s583
      $region64: #{scar_forward.1} parent=55 // pred_fallthru
        _
    $region56: #{scar_forward.1} parent=5 // pred_fallthru
      _
  $region6: #{scar_forward.1} parent=0 // loop_footer
    %s18 = sadd.s32 1, %s14
  $region7: #{scar_forward.1} parent=0 // loop_footer_branch
    %13 = sbr.rel target = $region3
  $region8: #{scar_forward.1} parent=0 // loop_exit
    _

</llo_original>
